<compile_context>
chip_gen: v7x
topology: tpu7x:2x2x1
jax: 0.10.0
libtpu: 0.0.40
codegen_flags: <defaults>
</compile_context>

<pallas_src>
import functools

import jax
import jax.numpy as jnp
from jax import lax
from jax.experimental import pallas as pl
from jax.experimental.pallas import tpu as pltpu


def _skel_kernel(img_ref, out_ref, *, num_iter, plane_h, plane_w, compute_dtype):
    x = img_ref[...].astype(compute_dtype)          # (gp*H, lp*W)
    gh, pw = x.shape
    multi_row = gh > plane_h                        # >1 plane stacked on sublanes

    # Per-plane boundary masks. Hoisted: built once, closed over by the loop
    # body (loop-invariant constants).
    lane = lax.broadcasted_iota(jnp.int32, (gh, pw), 1)
    left_edge = (lane % plane_w) == 0
    right_edge = (lane % plane_w) == (plane_w - 1)
    if multi_row:
        row = lax.broadcasted_iota(jnp.int32, (gh, pw), 0)
        top_edge = (row % plane_h) == 0
        bottom_edge = (row % plane_h) == (plane_h - 1)

    # 3-tap shifts with per-plane edge clamping (replicate own value at the
    # plane border; this also discards values leaking from a neighbouring
    # packed plane).  For a 3-tap min/max pool clamping is identical to
    # PyTorch's implicit +/-inf padding: min(x, x, n) == min(+inf, x, n).
    def shift_down(v):      # out[i, :] = v[i-1, :]
        s = jnp.concatenate([v[:1], v[:-1]], axis=0)
        return jnp.where(top_edge, v, s) if multi_row else s

    def shift_up(v):        # out[i, :] = v[i+1, :]
        s = jnp.concatenate([v[1:], v[-1:]], axis=0)
        return jnp.where(bottom_edge, v, s) if multi_row else s

    def shift_right(v):     # out[:, j] = v[:, j-1]
        return jnp.where(left_edge, v, jnp.roll(v, 1, axis=1))

    def shift_left(v):      # out[:, j] = v[:, j+1]
        return jnp.where(right_edge, v, jnp.roll(v, -1, axis=1))

    def erode(v):
        # min(-maxpool(-v, (3,1)), -maxpool(-v, (1,3)))
        vh = jnp.minimum(jnp.minimum(shift_down(v), v), shift_up(v))
        vw = jnp.minimum(jnp.minimum(shift_right(v), v), shift_left(v))
        return jnp.minimum(vh, vw)

    def dilate(v):
        # maxpool(v, (3,3)) separably: vertical 3-max, then horizontal 3-max.
        vh = jnp.maximum(jnp.maximum(shift_down(v), v), shift_up(v))
        return jnp.maximum(jnp.maximum(shift_right(vh), vh), shift_left(vh))

    def relu(v):
        return jnp.maximum(v, 0.0)

    # Erode-reuse: erode(img) is both this step's open() input and the next
    # step's image, so each iteration costs 1 erode + 1 dilate (ref: 2 + 1).
    e = erode(x)
    skel = relu(x.astype(jnp.float32) - dilate(e).astype(jnp.float32))

    def body(_, carry):
        e, skel = carry
        e_next = erode(e)
        delta = relu(e.astype(jnp.float32) - dilate(e_next).astype(jnp.float32))
        skel = skel + relu(delta - skel * delta)
        return e_next, skel

    _, skel = lax.fori_loop(0, num_iter, body, (e, skel))
    out_ref[...] = skel.astype(out_ref.dtype)


def soft_skeletonize(img, num_iter=40, compute_dtype=jnp.float32,
                     target_block_bytes=1 << 20):
    """img: (N, C, H, W) float array. Returns the soft skeleton, same shape/dtype.

    compute_dtype=jnp.float32 matches the PyTorch numerics exactly.
    jnp.bfloat16 roughly doubles VPU throughput on v6e/v7x (the skel
    accumulation stays float32); do not use bf16 on v5e (no bf16 VALU).
    """
    N, C, H, W = img.shape
    nplanes = N * C
    dtype = img.dtype
    itemsize = jnp.dtype(dtype).itemsize

    # --- lane packing: `lp` planes side by side along the 128-lane axis ------
    cap = max(1, 128 // W) if W <= 128 else 1
    lp = 1
    for d in range(min(cap, nplanes), 0, -1):
        if nplanes % d == 0:
            lp = d
            break
    groups = nplanes // lp
    pw = lp * W

    # --- sublane packing: stack `gp` packed groups along the sublane axis ----
    row_bytes = pw * itemsize
    cap_rows = max(H, target_block_bytes // max(1, row_bytes))
    gp_cap = max(1, min(groups, cap_rows // H))
    gp = 1
    for d in range(gp_cap, 0, -1):
        if groups % d == 0:
            gp = d
            break
    sgroups = groups // gp
    gh = gp * H

    # plane = ((sg*gp + g)*lp + p); row = g*H + h; lane = p*W + w
    x = img.reshape(sgroups, gp, lp, H, W)
    x = jnp.transpose(x, (0, 1, 3, 2, 4)).reshape(sgroups, gh, pw)

    kernel = functools.partial(
        _skel_kernel, num_iter=num_iter, plane_h=H, plane_w=W,
        compute_dtype=compute_dtype)

    # Whole-slab-resident design: scoped VMEM must cover double-buffered I/O
    # plus the carried (e, skel) and temporaries.  Cap at 64 MiB (v7x VMEM).
    slab_bytes = gh * pw * 4
    vmem_limit = int(min(64 * 2**20, max(32 * 2**20, 24 * slab_bytes)))

    out = pl.pallas_call(
        kernel,
        out_shape=jax.ShapeDtypeStruct((sgroups, gh, pw), dtype),
        grid_spec=pltpu.PrefetchScalarGridSpec(
            num_scalar_prefetch=0,
            grid=(sgroups,),
            in_specs=[pl.BlockSpec((None, gh, pw), lambda g: (g, 0, 0))],
            out_specs=pl.BlockSpec((None, gh, pw), lambda g: (g, 0, 0)),
        ),
        compiler_params=pltpu.CompilerParams(
            dimension_semantics=("parallel",),
            vmem_limit_bytes=vmem_limit,
        ),
    )(x)

    out = out.reshape(sgroups, gp, H, lp, W)
    out = jnp.transpose(out, (0, 1, 3, 2, 4)).reshape(N, C, H, W)
    return out


# ----------------------- pure-JAX reference (for checking) -------------------
def _ref_erode(img):
    neg = -img
    p1 = -lax.reduce_window(neg, -jnp.inf, lax.max, (1, 1, 3, 1), (1, 1, 1, 1),
                            ((0, 0), (0, 0), (1, 1), (0, 0)))
    p2 = -lax.reduce_window(neg, -jnp.inf, lax.max, (1, 1, 1, 3), (1, 1, 1, 1),
                            ((0, 0), (0, 0), (0, 0), (1, 1)))
    return jnp.minimum(p1, p2)


def _ref_dilate(img):
    return lax.reduce_window(img, -jnp.inf, lax.max, (1, 1, 3, 3), (1, 1, 1, 1),
                             ((0, 0), (0, 0), (1, 1), (1, 1)))


def _ref_soft_skel(img, num_iter):
    img1 = _ref_dilate(_ref_erode(img))
    skel = jax.nn.relu(img - img1)
    for _ in range(num_iter):
        img = _ref_erode(img)
        img1 = _ref_dilate(_ref_erode(img))
        delta = jax.nn.relu(img - img1)
        skel = skel + jax.nn.relu(delta - skel * delta)
    return skel


if __name__ == "__main__":
    key = jax.random.PRNGKey(0)
    x = jax.random.uniform(key, (2, 4, 16, 16), dtype=jnp.float32)

    num_iter = 40  # module default
    out = jax.block_until_ready(soft_skeletonize(x, num_iter=num_iter))

    ref = jax.block_until_ready(_ref_soft_skel(x, num_iter))
    assert out.shape == ref.shape and out.dtype == ref.dtype
    err = float(jnp.max(jnp.abs(out - ref)))
    assert err < 1e-5, f"mismatch vs. reference: max abs err {err}"

    print("KERNEL_OK")
</pallas_src>

<mosaic_0001>
module attributes {stable_mosaic.version = 11 : i64} {
  func.func @_skel_kernel(%arg0: i32, %arg1: memref<1x16x128xf32, #tpu.memory_space<vmem>>, %arg2: memref<1x16x128xf32, #tpu.memory_space<vmem>>) attributes {dimension_semantics = [#tpu.dimension_semantics<parallel>], iteration_bounds = array<i64: 1>, scalar_prefetch = 0 : i64, scratch_operands = 0 : i64, tpu.core_type = #tpu.core_type<tc>, window_params = [{transform_indices = @transform_0, window_bounds = array<i64: 1, 16, 128>}, {transform_indices = @transform_1, window_bounds = array<i64: 1, 16, 128>}]} {
    %c0 = arith.constant 0 : index
    %c0_0 = arith.constant 0 : index
    %c0_1 = arith.constant 0 : index
    %0 = vector.load %arg1[%c0, %c0_0, %c0_1] : memref<1x16x128xf32, #tpu.memory_space<vmem>>, vector<1x16x128xf32>
    %1 = vector.shape_cast %0 : vector<1x16x128xf32> to vector<16x128xf32>
    %2 = tpu.iota {dimensions = array<i32: 1>} : vector<16x128xi32>
    %c16_i32 = arith.constant 16 : i32
    %c0_i32 = arith.constant 0 : i32
    %3 = arith.cmpi eq, %c16_i32, %c0_i32 : i32
    %c1_i32 = arith.constant 1 : i32
    %4 = arith.select %3, %c1_i32, %c16_i32 : i32
    %5 = vector.broadcast %4 : i32 to vector<16x128xi32>
    %6 = arith.remsi %2, %5 : vector<16x128xi32>
    %c0_i32_2 = arith.constant 0 : i32
    %7 = vector.broadcast %c0_i32_2 : i32 to vector<16x128xi32>
    %8 = arith.cmpi ne, %6, %7 : vector<16x128xi32>
    %c0_i32_3 = arith.constant 0 : i32
    %9 = vector.broadcast %c0_i32_3 : i32 to vector<16x128xi32>
    %10 = arith.cmpi slt, %6, %9 : vector<16x128xi32>
    %c0_i32_4 = arith.constant 0 : i32
    %11 = arith.cmpi slt, %4, %c0_i32_4 : i32
    %12 = vector.broadcast %11 : i1 to vector<16x128xi1>
    %13 = vector.broadcast %12 : vector<16x128xi1> to vector<16x128xi1>
    %14 = arith.xori %10, %13 : vector<16x128xi1>
    %15 = arith.andi %14, %8 : vector<16x128xi1>
    %16 = vector.broadcast %4 : i32 to vector<16x128xi32>
    %17 = arith.addi %6, %16 : vector<16x128xi32>
    %18 = arith.select %15, %17, %6 : vector<16x128xi1>, vector<16x128xi32>
    %c0_i32_5 = arith.constant 0 : i32
    %19 = vector.broadcast %c0_i32_5 : i32 to vector<16x128xi32>
    %20 = arith.cmpi eq, %18, %19 : vector<16x128xi32>
    %c16_i32_6 = arith.constant 16 : i32
    %c0_i32_7 = arith.constant 0 : i32
    %21 = arith.cmpi eq, %c16_i32_6, %c0_i32_7 : i32
    %c1_i32_8 = arith.constant 1 : i32
    %22 = arith.select %21, %c1_i32_8, %c16_i32_6 : i32
    %23 = vector.broadcast %22 : i32 to vector<16x128xi32>
    %24 = arith.remsi %2, %23 : vector<16x128xi32>
    %c0_i32_9 = arith.constant 0 : i32
    %25 = vector.broadcast %c0_i32_9 : i32 to vector<16x128xi32>
    %26 = arith.cmpi ne, %24, %25 : vector<16x128xi32>
    %c0_i32_10 = arith.constant 0 : i32
    %27 = vector.broadcast %c0_i32_10 : i32 to vector<16x128xi32>
    %28 = arith.cmpi slt, %24, %27 : vector<16x128xi32>
    %c0_i32_11 = arith.constant 0 : i32
    %29 = arith.cmpi slt, %22, %c0_i32_11 : i32
    %30 = vector.broadcast %29 : i1 to vector<16x128xi1>
    %31 = vector.broadcast %30 : vector<16x128xi1> to vector<16x128xi1>
    %32 = arith.xori %28, %31 : vector<16x128xi1>
    %33 = arith.andi %32, %26 : vector<16x128xi1>
    %34 = vector.broadcast %22 : i32 to vector<16x128xi32>
    %35 = arith.addi %24, %34 : vector<16x128xi32>
    %36 = arith.select %33, %35, %24 : vector<16x128xi1>, vector<16x128xi32>
    %c15_i32 = arith.constant 15 : i32
    %37 = vector.broadcast %c15_i32 : i32 to vector<16x128xi32>
    %38 = arith.cmpi eq, %36, %37 : vector<16x128xi32>
    %39 = vector.extract_strided_slice %1 {offsets = [0, 0], sizes = [1, 128], strides = [1, 1]} : vector<16x128xf32> to vector<1x128xf32>
    %40 = vector.extract_strided_slice %1 {offsets = [0, 0], sizes = [15, 128], strides = [1, 1]} : vector<16x128xf32> to vector<15x128xf32>
    %41 = tpu.concatenate %39, %40 in 0 : vector<1x128xf32>, vector<15x128xf32> -> vector<16x128xf32>
    %42 = arith.minimumf %41, %1 : vector<16x128xf32>
    %43 = vector.extract_strided_slice %1 {offsets = [1, 0], sizes = [15, 128], strides = [1, 1]} : vector<16x128xf32> to vector<15x128xf32>
    %44 = vector.extract_strided_slice %1 {offsets = [15, 0], sizes = [1, 128], strides = [1, 1]} : vector<16x128xf32> to vector<1x128xf32>
    %45 = tpu.concatenate %43, %44 in 0 : vector<15x128xf32>, vector<1x128xf32> -> vector<16x128xf32>
    %46 = arith.minimumf %42, %45 : vector<16x128xf32>
    %47 = vector.extract_strided_slice %1 {offsets = [0, 127], sizes = [16, 1], strides = [1, 1]} : vector<16x128xf32> to vector<16x1xf32>
    %48 = vector.extract_strided_slice %1 {offsets = [0, 0], sizes = [16, 127], strides = [1, 1]} : vector<16x128xf32> to vector<16x127xf32>
    %49 = tpu.concatenate %47, %48 in 1 : vector<16x1xf32>, vector<16x127xf32> -> vector<16x128xf32>
    %50 = arith.select %20, %1, %49 : vector<16x128xi1>, vector<16x128xf32>
    %51 = arith.minimumf %50, %1 : vector<16x128xf32>
    %52 = vector.extract_strided_slice %1 {offsets = [0, 1], sizes = [16, 127], strides = [1, 1]} : vector<16x128xf32> to vector<16x127xf32>
    %53 = vector.extract_strided_slice %1 {offsets = [0, 0], sizes = [16, 1], strides = [1, 1]} : vector<16x128xf32> to vector<16x1xf32>
    %54 = tpu.concatenate %52, %53 in 1 : vector<16x127xf32>, vector<16x1xf32> -> vector<16x128xf32>
    %55 = arith.select %38, %1, %54 : vector<16x128xi1>, vector<16x128xf32>
    %56 = arith.minimumf %51, %55 : vector<16x128xf32>
    %57 = arith.minimumf %46, %56 : vector<16x128xf32>
    %58 = vector.extract_strided_slice %57 {offsets = [0, 0], sizes = [1, 128], strides = [1, 1]} : vector<16x128xf32> to vector<1x128xf32>
    %59 = vector.extract_strided_slice %57 {offsets = [0, 0], sizes = [15, 128], strides = [1, 1]} : vector<16x128xf32> to vector<15x128xf32>
    %60 = tpu.concatenate %58, %59 in 0 : vector<1x128xf32>, vector<15x128xf32> -> vector<16x128xf32>
    %61 = arith.maximumf %60, %57 : vector<16x128xf32>
    %62 = vector.extract_strided_slice %57 {offsets = [1, 0], sizes = [15, 128], strides = [1, 1]} : vector<16x128xf32> to vector<15x128xf32>
    %63 = vector.extract_strided_slice %57 {offsets = [15, 0], sizes = [1, 128], strides = [1, 1]} : vector<16x128xf32> to vector<1x128xf32>
    %64 = tpu.concatenate %62, %63 in 0 : vector<15x128xf32>, vector<1x128xf32> -> vector<16x128xf32>
    %65 = arith.maximumf %61, %64 : vector<16x128xf32>
    %66 = vector.extract_strided_slice %65 {offsets = [0, 127], sizes = [16, 1], strides = [1, 1]} : vector<16x128xf32> to vector<16x1xf32>
    %67 = vector.extract_strided_slice %65 {offsets = [0, 0], sizes = [16, 127], strides = [1, 1]} : vector<16x128xf32> to vector<16x127xf32>
    %68 = tpu.concatenate %66, %67 in 1 : vector<16x1xf32>, vector<16x127xf32> -> vector<16x128xf32>
    %69 = arith.select %20, %65, %68 : vector<16x128xi1>, vector<16x128xf32>
    %70 = arith.maximumf %69, %65 : vector<16x128xf32>
    %71 = vector.extract_strided_slice %65 {offsets = [0, 1], sizes = [16, 127], strides = [1, 1]} : vector<16x128xf32> to vector<16x127xf32>
    %72 = vector.extract_strided_slice %65 {offsets = [0, 0], sizes = [16, 1], strides = [1, 1]} : vector<16x128xf32> to vector<16x1xf32>
    %73 = tpu.concatenate %71, %72 in 1 : vector<16x127xf32>, vector<16x1xf32> -> vector<16x128xf32>
    %74 = arith.select %38, %65, %73 : vector<16x128xi1>, vector<16x128xf32>
    %75 = arith.maximumf %70, %74 : vector<16x128xf32>
    %76 = arith.subf %1, %75 : vector<16x128xf32>
    %cst = arith.constant 0.000000e+00 : f32
    %77 = vector.broadcast %cst : f32 to vector<16x128xf32>
    %78 = arith.maximumf %76, %77 : vector<16x128xf32>
    %c0_i32_12 = arith.constant 0 : i32
    %c40_i32 = arith.constant 40 : i32
    %79 = arith.addi %c0_i32_12, %c40_i32 : i32
    %c1_i32_13 = arith.constant 1 : i32
    %80:2 = scf.for %arg3 = %c0_i32_12 to %79 step %c1_i32_13 iter_args(%arg4 = %57, %arg5 = %78) -> (vector<16x128xf32>, vector<16x128xf32>)  : i32 {
      %84 = vector.extract_strided_slice %arg4 {offsets = [0, 0], sizes = [1, 128], strides = [1, 1]} : vector<16x128xf32> to vector<1x128xf32>
      %85 = vector.extract_strided_slice %arg4 {offsets = [0, 0], sizes = [15, 128], strides = [1, 1]} : vector<16x128xf32> to vector<15x128xf32>
      %86 = tpu.concatenate %84, %85 in 0 : vector<1x128xf32>, vector<15x128xf32> -> vector<16x128xf32>
      %87 = arith.minimumf %86, %arg4 : vector<16x128xf32>
      %88 = vector.extract_strided_slice %arg4 {offsets = [1, 0], sizes = [15, 128], strides = [1, 1]} : vector<16x128xf32> to vector<15x128xf32>
      %89 = vector.extract_strided_slice %arg4 {offsets = [15, 0], sizes = [1, 128], strides = [1, 1]} : vector<16x128xf32> to vector<1x128xf32>
      %90 = tpu.concatenate %88, %89 in 0 : vector<15x128xf32>, vector<1x128xf32> -> vector<16x128xf32>
      %91 = arith.minimumf %87, %90 : vector<16x128xf32>
      %92 = vector.extract_strided_slice %arg4 {offsets = [0, 127], sizes = [16, 1], strides = [1, 1]} : vector<16x128xf32> to vector<16x1xf32>
      %93 = vector.extract_strided_slice %arg4 {offsets = [0, 0], sizes = [16, 127], strides = [1, 1]} : vector<16x128xf32> to vector<16x127xf32>
      %94 = tpu.concatenate %92, %93 in 1 : vector<16x1xf32>, vector<16x127xf32> -> vector<16x128xf32>
      %95 = arith.select %20, %arg4, %94 : vector<16x128xi1>, vector<16x128xf32>
      %96 = arith.minimumf %95, %arg4 : vector<16x128xf32>
      %97 = vector.extract_strided_slice %arg4 {offsets = [0, 1], sizes = [16, 127], strides = [1, 1]} : vector<16x128xf32> to vector<16x127xf32>
      %98 = vector.extract_strided_slice %arg4 {offsets = [0, 0], sizes = [16, 1], strides = [1, 1]} : vector<16x128xf32> to vector<16x1xf32>
      %99 = tpu.concatenate %97, %98 in 1 : vector<16x127xf32>, vector<16x1xf32> -> vector<16x128xf32>
      %100 = arith.select %38, %arg4, %99 : vector<16x128xi1>, vector<16x128xf32>
      %101 = arith.minimumf %96, %100 : vector<16x128xf32>
      %102 = arith.minimumf %91, %101 : vector<16x128xf32>
      %103 = vector.extract_strided_slice %102 {offsets = [0, 0], sizes = [1, 128], strides = [1, 1]} : vector<16x128xf32> to vector<1x128xf32>
      %104 = vector.extract_strided_slice %102 {offsets = [0, 0], sizes = [15, 128], strides = [1, 1]} : vector<16x128xf32> to vector<15x128xf32>
      %105 = tpu.concatenate %103, %104 in 0 : vector<1x128xf32>, vector<15x128xf32> -> vector<16x128xf32>
      %106 = arith.maximumf %105, %102 : vector<16x128xf32>
      %107 = vector.extract_strided_slice %102 {offsets = [1, 0], sizes = [15, 128], strides = [1, 1]} : vector<16x128xf32> to vector<15x128xf32>
      %108 = vector.extract_strided_slice %102 {offsets = [15, 0], sizes = [1, 128], strides = [1, 1]} : vector<16x128xf32> to vector<1x128xf32>
      %109 = tpu.concatenate %107, %108 in 0 : vector<15x128xf32>, vector<1x128xf32> -> vector<16x128xf32>
      %110 = arith.maximumf %106, %109 : vector<16x128xf32>
      %111 = vector.extract_strided_slice %110 {offsets = [0, 127], sizes = [16, 1], strides = [1, 1]} : vector<16x128xf32> to vector<16x1xf32>
      %112 = vector.extract_strided_slice %110 {offsets = [0, 0], sizes = [16, 127], strides = [1, 1]} : vector<16x128xf32> to vector<16x127xf32>
      %113 = tpu.concatenate %111, %112 in 1 : vector<16x1xf32>, vector<16x127xf32> -> vector<16x128xf32>
      %114 = arith.select %20, %110, %113 : vector<16x128xi1>, vector<16x128xf32>
      %115 = arith.maximumf %114, %110 : vector<16x128xf32>
      %116 = vector.extract_strided_slice %110 {offsets = [0, 1], sizes = [16, 127], strides = [1, 1]} : vector<16x128xf32> to vector<16x127xf32>
      %117 = vector.extract_strided_slice %110 {offsets = [0, 0], sizes = [16, 1], strides = [1, 1]} : vector<16x128xf32> to vector<16x1xf32>
      %118 = tpu.concatenate %116, %117 in 1 : vector<16x127xf32>, vector<16x1xf32> -> vector<16x128xf32>
      %119 = arith.select %38, %110, %118 : vector<16x128xi1>, vector<16x128xf32>
      %120 = arith.maximumf %115, %119 : vector<16x128xf32>
      %121 = arith.subf %arg4, %120 : vector<16x128xf32>
      %cst_17 = arith.constant 0.000000e+00 : f32
      %122 = vector.broadcast %cst_17 : f32 to vector<16x128xf32>
      %123 = arith.maximumf %121, %122 : vector<16x128xf32>
      %124 = arith.mulf %arg5, %123 : vector<16x128xf32>
      %125 = arith.subf %123, %124 : vector<16x128xf32>
      %cst_18 = arith.constant 0.000000e+00 : f32
      %126 = vector.broadcast %cst_18 : f32 to vector<16x128xf32>
      %127 = arith.maximumf %125, %126 : vector<16x128xf32>
      %128 = arith.addf %arg5, %127 : vector<16x128xf32>
      scf.yield %102, %128 : vector<16x128xf32>, vector<16x128xf32>
    }
    %c0_14 = arith.constant 0 : index
    %c0_15 = arith.constant 0 : index
    %c0_16 = arith.constant 0 : index
    %81 = vector.load %arg2[%c0_14, %c0_15, %c0_16] : memref<1x16x128xf32, #tpu.memory_space<vmem>>, vector<1x16x128xf32>
    %82 = vector.shape_cast %81 : vector<1x16x128xf32> to vector<16x128xf32>
    %83 = vector.shape_cast %80#1 : vector<16x128xf32> to vector<1x16x128xf32>
    tpu.vector_store %arg2[%c0_14, %c0_15, %c0_16], %83 {strides = array<i32>} : memref<1x16x128xf32, #tpu.memory_space<vmem>>, vector<1x16x128xf32>,
    return
  }
  func.func @transform_0(%arg0: i32) -> (i32, i32, i32) {
    %c0_i32 = arith.constant 0 : i32
    %c0_i32_0 = arith.constant 0 : i32
    %c0_i32_1 = arith.constant 0 : i32
    return %arg0, %c0_i32, %c0_i32_0 : i32, i32, i32
  }
  func.func @transform_1(%arg0: i32) -> (i32, i32, i32) {
    %c0_i32 = arith.constant 0 : i32
    %c0_i32_0 = arith.constant 0 : i32
    %c0_i32_1 = arith.constant 0 : i32
    return %arg0, %c0_i32, %c0_i32_0 : i32, i32, i32
  }
}

</mosaic_0001>

<llo_original>
// kernel: tpu_custom_call.1
$region0: #{tpu_custom_call.1}
  #allocation0 [shape = 'u32[]', space=smem, size = 0x4, offset = 0x4, fixed_abs, tag = 'smem constant byte address 0x4 - core index']
  #allocation1 [shape = 'u32[144,128]{1,0:T(1,128)}', space=vmem, size = 0x12000, scoped, tag = 'internal scratch']
  %s0 = inlined_call_operand.hbm [shape: f32[1,16,128], index: 0, kind: input, shape index: {}]
  %s1 = inlined_call_operand.hbm [shape: f32[1,16,128], index: 1, kind: output, shape index: {}]
  %s2 = sld [smem:[#allocation0]]
  $region25: #{tpu_custom_call.1} parent=0
    _
  %s4 = ssub.s32 1, %s2
  %s5 = scalar_select 0, %s4, %s2
  $region1: #{tpu_custom_call.1} parent=0
    #allocation2 [shape = 'u8[8192]{0}', space=vmem, size = 0x2000, scoped, tag = 'input window, operand 0, single buffered']
    #allocation3 [shape = 's32[1]{0}', space=sflag, size = 0x4, scoped, tag = 'scoped memory for tpu_custom_call.1']
    #allocation4 [shape = 's32[1]{0}', space=sflag, size = 0x4, scoped, tag = 'scoped memory for tpu_custom_call.1']
    #allocation5 [shape = 'u8[8192]{0}', space=vmem, size = 0x2000, scoped, tag = 'output window, operand 0, single buffered']
    %6 = vsyncpa [#allocation3], 0
    %7 = vsyncpa [#allocation4], 0
    // Predicated region
    $region2: #{tpu_custom_call.1} parent=1 // pred_check
      _
    $region3: #{tpu_custom_call.1} parent=1 // pred_check_branch
      %9 = sbr.rel (0) target = $region5
    $region4: #{tpu_custom_call.1} parent=1 // pred_region
      %s11 = ssub.s32 256, 256
      %12 = vsyncadd [#allocation3], %s11
      %s13 = sshll.u32 [#allocation2], 4
      %s14 = int_to_ptr.vmem [resolvable:$true] %s13
      %19 = dma.hbm_to_vmem [thread:$0]  %s0, 256, %s14, [#allocation3], 128, 128, 8
    $region5: #{tpu_custom_call.1} parent=1 // pred_fallthru
      _
    // Predicated region
    $region6: #{tpu_custom_call.1} parent=1 // pred_check
      _
    $region7: #{tpu_custom_call.1} parent=1 // pred_check_branch
      %21 = sbr.rel (0) target = $region9
    $region8: #{tpu_custom_call.1} parent=1 // pred_region
      %22 = dma.done [#allocation3], 256
    $region9: #{tpu_custom_call.1} parent=1 // pred_fallthru
      _
    %v23 = vld [vmem:[#allocation2] sm:$0xff]
    %v24 = vld [vmem:[#allocation2 + $0x8] sm:$0xff]
    %v25 = vlaneseq
    %v26 = vand.u32 %v25, 127
    %vm27 = vcmp.lt.s32.totalorder %v26, 0
    %v28 = vsub.s32 0, %v26
    %v29 = vsel %vm27, %v28, %v26
    %v30 = vshrl.u32 %v29, 4
    %v31 = vand.u32 %v29, 15
    %v32 = vsub.s32 0, %v31
    %v33 = vsel %vm27, %v32, %v31
    %vm34 = vcmp.ne.s32.totalorder %v33, 0
    %vm35 = vcmp.lt.s32.totalorder %v33, 0
    %vm36 = vmand %vm35, %vm34
    %v37 = vadd.s32 %v33, 16
    %v38 = vsel %vm36, %v37, %v33
    %vm39 = vcmp.eq.s32.totalorder %v38, 0
    %vm40 = vcmp.eq.s32.totalorder %v38, 15
    %vm43 = vcmask 1040384
    %v44 = vrot.slane %v23, 7
    %v45 = vrot.slane %v24, 7
    %v46 = vsel %vm43, %v44, %v45
    %v49 = vsel %vm43, %v23, %v44
    %v50 = vmin.f32 %v49, %v23
    %v51 = vmin.f32 %v46, %v24
    %vm52 = vcmask 1046528
    %v53 = vrot.slane %v23, 1
    %v54 = vrot.slane %v24, 1
    %v55 = vsel %vm52, %v53, %v54
    %v58 = vsel %vm52, %v54, %v24
    %v59 = vmin.f32 %v50, %v55
    %v60 = vmin.f32 %v51, %v58
    %61 = vrot.lane.b32.xlu0 %v23, 1
    %v62 = vpop.permute.xlu0 %61
    %63 = vrot.lane.b32.xlu0 %v24, 1
    %v64 = vpop.permute.xlu0 %63
    %v67 = vsel %vm39, %v23, %v62
    %v68 = vsel %vm39, %v24, %v64
    %v69 = vmin.f32 %v67, %v23
    %v70 = vmin.f32 %v68, %v24
    %71 = vrot.lane.b32.xlu0 %v23, 127
    %v72 = vpop.permute.xlu0 %71
    %73 = vrot.lane.b32.xlu0 %v24, 127
    %v74 = vpop.permute.xlu0 %73
    %v77 = vsel %vm40, %v23, %v72
    %v78 = vsel %vm40, %v24, %v74
    %v79 = vmin.f32 %v69, %v77
    %v80 = vmin.f32 %v70, %v78
    %v81 = vmin.f32 %v59, %v79
    %v82 = vmin.f32 %v60, %v80
    %v85 = vrot.slane %v81, 7
    %v86 = vrot.slane %v82, 7
    %v87 = vsel %vm43, %v85, %v86
    %v90 = vsel %vm43, %v81, %v85
    %v91 = vmax.f32 %v90, %v81
    %v92 = vmax.f32 %v87, %v82
    %v93 = vrot.slane %v81, 1
    %v94 = vrot.slane %v82, 1
    %v95 = vsel %vm52, %v93, %v94
    %v98 = vsel %vm52, %v94, %v82
    %v99 = vmax.f32 %v91, %v95
    %v100 = vmax.f32 %v92, %v98
    %103 = vrot.lane.b32.xlu0 %v99, 1
    %v104 = vpop.permute.xlu0 %103
    %105 = vrot.lane.b32.xlu0 %v100, 1
    %v106 = vpop.permute.xlu0 %105
    %v109 = vsel %vm39, %v99, %v104
    %v110 = vsel %vm39, %v100, %v106
    %v111 = vmax.f32 %v109, %v99
    %v112 = vmax.f32 %v110, %v100
    %113 = vrot.lane.b32.xlu0 %v99, 127
    %v114 = vpop.permute.xlu0 %113
    %115 = vrot.lane.b32.xlu0 %v100, 127
    %v116 = vpop.permute.xlu0 %115
    %v119 = vsel %vm40, %v99, %v114
    %v120 = vsel %vm40, %v100, %v116
    %v121 = vmax.f32 %v111, %v119
    %v122 = vmax.f32 %v112, %v120
    %v123 = vsub.f32 %v23, %v121
    %v124 = vsub.f32 %v24, %v122
    %v125 = vmax.f32 %v123, 0.0
    %v126 = vmax.f32 %v124, 0.0
    loop: start=0, step=1, limit=40
    $region10: #{tpu_custom_call.1} parent=1 // loop_pre_header
      _
    $region11: #{tpu_custom_call.1} parent=1 // loop_header
      %s128 = sphi 0, %s132
      %p129 = scmp.ge.s32.totalorder %s128, 40
      %v133 = vphi %v81, %v175
      %v134 = vphi %v82, %v176
      %v135 = vphi %v125, %v227
      %v136 = vphi %v126, %v228
    $region12: #{tpu_custom_call.1} parent=1 // loop_header_branch
      %131 = sbr.rel (%p129) target = $region16
    $region13: #{tpu_custom_call.1} parent=1 // loop_body
      %v139 = vrot.slane %v133, 7
      %v140 = vrot.slane %v134, 7
      %v141 = vsel %vm43, %v139, %v140
      %v144 = vsel %vm43, %v133, %v139
      %v145 = vmin.f32 %v144, %v133
      %v146 = vmin.f32 %v141, %v134
      %v147 = vrot.slane %v133, 1
      %v148 = vrot.slane %v134, 1
      %v149 = vsel %vm52, %v147, %v148
      %v152 = vsel %vm52, %v148, %v134
      %v153 = vmin.f32 %v145, %v149
      %v154 = vmin.f32 %v146, %v152
      %155 = vrot.lane.b32.xlu0 %v133, 1
      %v156 = vpop.permute.xlu0 %155
      %157 = vrot.lane.b32.xlu0 %v134, 1
      %v158 = vpop.permute.xlu0 %157
      %v161 = vsel %vm39, %v133, %v156
      %v162 = vsel %vm39, %v134, %v158
      %v163 = vmin.f32 %v161, %v133
      %v164 = vmin.f32 %v162, %v134
      %165 = vrot.lane.b32.xlu0 %v133, 127
      %v166 = vpop.permute.xlu0 %165
      %167 = vrot.lane.b32.xlu0 %v134, 127
      %v168 = vpop.permute.xlu0 %167
      %v171 = vsel %vm40, %v133, %v166
      %v172 = vsel %vm40, %v134, %v168
      %v173 = vmin.f32 %v163, %v171
      %v174 = vmin.f32 %v164, %v172
      %v175 = vmin.f32 %v153, %v173
      %v176 = vmin.f32 %v154, %v174
      %v179 = vrot.slane %v175, 7
      %v180 = vrot.slane %v176, 7
      %v181 = vsel %vm43, %v179, %v180
      %v184 = vsel %vm43, %v175, %v179
      %v185 = vmax.f32 %v184, %v175
      %v186 = vmax.f32 %v181, %v176
      %v187 = vrot.slane %v175, 1
      %v188 = vrot.slane %v176, 1
      %v189 = vsel %vm52, %v187, %v188
      %v192 = vsel %vm52, %v188, %v176
      %v193 = vmax.f32 %v185, %v189
      %v194 = vmax.f32 %v186, %v192
      %197 = vrot.lane.b32.xlu0 %v193, 1
      %v198 = vpop.permute.xlu0 %197
      %199 = vrot.lane.b32.xlu0 %v194, 1
      %v200 = vpop.permute.xlu0 %199
      %v203 = vsel %vm39, %v193, %v198
      %v204 = vsel %vm39, %v194, %v200
      %v205 = vmax.f32 %v203, %v193
      %v206 = vmax.f32 %v204, %v194
      %207 = vrot.lane.b32.xlu0 %v193, 127
      %v208 = vpop.permute.xlu0 %207
      %209 = vrot.lane.b32.xlu0 %v194, 127
      %v210 = vpop.permute.xlu0 %209
      %v213 = vsel %vm40, %v193, %v208
      %v214 = vsel %vm40, %v194, %v210
      %v215 = vmax.f32 %v205, %v213
      %v216 = vmax.f32 %v206, %v214
      %v217 = vsub.f32 %v133, %v215
      %v218 = vsub.f32 %v134, %v216
      %v219 = vmax.f32 %v217, 0.0
      %v220 = vmax.f32 %v218, 0.0
      %v221 = vmul.f32 %v135, %v219
      %v222 = vmul.f32 %v136, %v220
      %v223 = vsub.f32 %v219, %v221
      %v224 = vsub.f32 %v220, %v222
      %v225 = vmax.f32 %v223, 0.0
      %v226 = vmax.f32 %v224, 0.0
      %v227 = vadd.f32 %v135, %v225
      %v228 = vadd.f32 %v136, %v226
    $region14: #{tpu_custom_call.1} parent=1 // loop_footer
      %s132 = sadd.s32 1, %s128
    $region15: #{tpu_custom_call.1} parent=1 // loop_footer_branch
      %127 = sbr.rel target = $region11
    $region16: #{tpu_custom_call.1} parent=1 // loop_exit
      _
    %229 = vst [vmem:[#allocation5] sm:$0xff] %v135
    %230 = vst [vmem:[#allocation5 + $0x8] sm:$0xff] %v136
    // Predicated region
    $region17: #{tpu_custom_call.1} parent=1 // pred_check
      _
    $region18: #{tpu_custom_call.1} parent=1 // pred_check_branch
      %232 = sbr.rel (0) target = $region20
    $region19: #{tpu_custom_call.1} parent=1 // pred_region
      %s234 = ssub.s32 256, 256
      %235 = vsyncadd [#allocation4], %s234
      %s236 = sshll.u32 [#allocation5], 4
      %s237 = int_to_ptr.vmem [resolvable:$true] %s236
      %242 = dma.vmem_to_hbm [thread:$0]  %s237, 256, %s1, [#allocation4], 128, 128, 8
    $region20: #{tpu_custom_call.1} parent=1 // pred_fallthru
      _
    // Predicated region
    $region21: #{tpu_custom_call.1} parent=1 // pred_check
      _
    $region22: #{tpu_custom_call.1} parent=1 // pred_check_branch
      %244 = sbr.rel (0) target = $region24
    $region23: #{tpu_custom_call.1} parent=1 // pred_region
      %245 = dma.done [#allocation4], 256
    $region24: #{tpu_custom_call.1} parent=1 // pred_fallthru
      _
    %246 = vsyncpa [#allocation3], 1
    %247 = vsyncpa [#allocation4], 1

</llo_original>
